<compile_context>
chip_gen: v6e
topology: v6e:2x2x1
jax: 0.10.0
libtpu: 0.0.40
codegen_flags: <defaults>
</compile_context>

<pallas_src>
import functools

import jax
import jax.numpy as jnp
from jax.experimental import pallas as pl
from jax.experimental.pallas import tpu as pltpu

LANE = 128      # vreg lane width (v5e MXU is 128x128; see note on 256 below)
SUBLANE = 8     # vreg sublane count (f32)


def _round_up(x, m):
    return ((x + m - 1) // m) * m


def _cdiv(a, b):
    return -(-a // b)


def _vmem_capacity_bytes():
    """Per-TensorCore VMEM capacity; conservative fallback if query fails."""
    try:
        return int(pltpu.get_tpu_info().vmem_capacity_bytes)
    except Exception:
        return 64 * (1 << 20)   # v7x per-TC size (the smallest of v5e/v6e/v7x)


def _fcnet_fused_kernel(*refs, n_layers: int, compute_dtype):
    """refs = (x_ref, w1, b1, w2, b2, ..., wn, bn, o_ref).

    x_ref: [TB, D0]          (un-padded feature dim, compute_dtype)
    w_i:   [D(i-1)p, Dip]    (compute_dtype; zero-padded rows/cols)
    b_i:   [1, Dip]          (f32, zero-padded cols)
    o_ref: [TB, Dnp]
    """
    x_ref = refs[0]
    o_ref = refs[-1]

    h = x_ref[...]
    if h.dtype != compute_dtype:
        h = h.astype(compute_dtype)

    for i in range(n_layers):
        w_ref = refs[1 + 2 * i]
        b_ref = refs[2 + 2 * i]
        # MXU inputs in compute_dtype (bf16 by default), f32 accumulation.
        lhs = h if h.dtype == compute_dtype else h.astype(compute_dtype)
        acc = jnp.dot(lhs, w_ref[...], preferred_element_type=jnp.float32)
        acc = acc + b_ref[...]            # f32 epilogue (broadcast [1, D])
        if i != n_layers - 1:
            acc = jnp.maximum(acc, 0.0)   # ReLU in f32
        h = acc

    o_ref[...] = h.astype(o_ref.dtype)


def init_fcnet_params(key, layer_sizes):
    """Matches PyTorch FCNet init (shapes transposed: W is [in, out]).

    kaiming_normal_ on weights (std = sqrt(2 / fan_in)); PyTorch Linear
    default bias init U(-1/sqrt(fan_in), 1/sqrt(fan_in)).
    """
    params = []
    for i in range(len(layer_sizes) - 1):
        fan_in, fan_out = layer_sizes[i], layer_sizes[i + 1]
        key, wk, bk = jax.random.split(key, 3)
        std = (2.0 / fan_in) ** 0.5
        w = std * jax.random.normal(wk, (fan_in, fan_out), dtype=jnp.float32)
        bound = 1.0 / (fan_in ** 0.5)
        b = jax.random.uniform(
            bk, (1, fan_out), minval=-bound, maxval=bound, dtype=jnp.float32
        )
        params.append((w, b))
    return params


def pad_fcnet_params(params, in_dim, *, compute_dtype=jnp.bfloat16,
                     lane_multiple=LANE):
    """Zero-pad hidden/output feature dims to lane multiples and cast weights.

    The INPUT feature dim is intentionally left un-padded: the kernel loads x
    with block dim == full array dim, so x never needs an HBM repad.
    Padded columns/rows are exactly zero, so padded activations stay zero
    through matmul + bias + ReLU of every layer.

    On v6e/v7x (2x256x256 MXU) pass lane_multiple=256 for layers whose true
    dims are >= 256 to fill the systolic array; keep 128 on v5e.
    """
    dims = [in_dim] + [w.shape[1] for (w, _) in params]
    dims_p = [dims[0]] + [_round_up(d, lane_multiple) for d in dims[1:]]
    padded = []
    for i, (w, b) in enumerate(params):
        din_p, dout_p = dims_p[i], dims_p[i + 1]
        wp = jnp.zeros((din_p, dout_p), jnp.float32)
        wp = wp.at[: w.shape[0], : w.shape[1]].set(w).astype(compute_dtype)
        bp = jnp.zeros((1, dout_p), jnp.float32).at[:, : b.shape[1]].set(b)
        padded.append((wp, bp))
    return padded, dims, dims_p


def _weight_bias_specs(padded_params, single_buffer):
    """Grid-invariant (VMEM-resident) weight/bias specs."""
    kw = {"pipeline_mode": pl.Buffered(1)} if single_buffer else {}
    specs = []
    for wp, _ in padded_params:
        din_p, dout_p = wp.shape
        specs.append(pl.BlockSpec((din_p, dout_p), lambda i: (0, 0), **kw))
        specs.append(pl.BlockSpec((1, dout_p), lambda i: (0, 0), **kw))
    return specs


def fcnet_forward(padded_params, dims, dims_p, x, *, max_tile_rows=None,
                  compute_dtype=jnp.bfloat16, out_dtype=None):
    """Fused FCNet forward: one pallas_call for the whole MLP."""
    B, Din = x.shape
    assert Din == dims[0] == dims_p[0]
    n_layers = len(padded_params)
    out_dtype = x.dtype if out_dtype is None else out_dtype

    vmem_cap = _vmem_capacity_bytes()
    if max_tile_rows is None:
        # v7x (64 MiB VMEM): keep activation tiles modest; v5e/v6e (128 MiB):
        # bigger tiles amortize per-step overhead.
        max_tile_rows = 512 if vmem_cap <= 64 * (1 << 20) else 1024

    # ---- batch tiling -------------------------------------------------
    B8 = _round_up(B, SUBLANE)
    if B8 <= LANE:
        tb = B8                               # single small tile
    else:
        # Multiples of 128 rows (full MXU passes, unmasked vst tiles) and at
        # least 2 grid steps so the "parallel" axis engages both TCs on v7x.
        tb = min(_round_up(max_tile_rows, LANE),
                 _round_up(_cdiv(B8, 2), LANE))
    Bp = _round_up(B, tb)

    # ---- input: cast once to compute_dtype, pad only remainder rows ----
    xp = x if x.dtype == compute_dtype else x.astype(compute_dtype)
    if Bp != B:
        xp = jnp.pad(xp, ((0, Bp - B), (0, 0)))

    # ---- VMEM budget ----------------------------------------------------
    w_bytes = sum(int(w.size) * w.dtype.itemsize + int(b.size) * b.dtype.itemsize
                  for w, b in padded_params)          # single-buffered residents
    io_bytes = (2 * tb * Din * jnp.dtype(compute_dtype).itemsize
                + 2 * tb * dims_p[-1] * jnp.dtype(out_dtype).itemsize)
    act_bytes = 3 * tb * max(dims_p) * 4              # live f32 chain + bf16 copy
    est = w_bytes + io_bytes + act_bytes
    vmem_limit = int(max(2 * est, 32 * (1 << 20)))
    vmem_limit = min(vmem_limit, vmem_cap - 16 * (1 << 20))
    # TODO(synk): if a single layer's weights exceed this budget, K-tile that
    # layer (extra reduction grid axis / pltpu.emit_pipeline) instead of
    # holding it fully resident.

    kernel = functools.partial(
        _fcnet_fused_kernel, n_layers=n_layers, compute_dtype=compute_dtype
    )
    flat_inputs = [xp]
    for wp, bp in padded_params:
        flat_inputs += [wp, bp]

    def _run(optimized):
        in_specs = [pl.BlockSpec((tb, Din), lambda i: (i, 0))]
        in_specs += _weight_bias_specs(padded_params, single_buffer=optimized)
        cp = pltpu.CompilerParams(
            dimension_semantics=("parallel",),
            vmem_limit_bytes=vmem_limit if optimized else None,
        )
        return pl.pallas_call(
            kernel,
            out_shape=jax.ShapeDtypeStruct((Bp, dims_p[-1]), out_dtype),
            grid=(Bp // tb,),
            in_specs=in_specs,
            out_specs=pl.BlockSpec((tb, dims_p[-1]), lambda i: (i, 0)),
            compiler_params=cp,
        )(*flat_inputs)

    try:
        out_p = _run(optimized=True)
    except Exception:
        # Defensive fallback to the known-good default-buffered configuration
        # (e.g. if single-buffering / the VMEM budget is rejected on some
        # generation); semantics are identical.
        out_p = _run(optimized=False)

    return out_p[:B, : dims[-1]]


def fcnet_ref(params, x):
    """Pure-JAX reference for correctness checking."""
    n = len(params)
    for i, (w, b) in enumerate(params):
        x = x @ w + b
        if i != n - 1:
            x = jnp.maximum(x, 0.0)
    return x


if __name__ == "__main__":
    layer_sizes = [32, 64, 64, 16]   # FCNet(layer_sizes)
    batch = 8

    key = jax.random.PRNGKey(0)
    key, xk = jax.random.split(key)
    x = jax.random.normal(xk, (batch, layer_sizes[0]), dtype=jnp.float32)

    params = init_fcnet_params(key, layer_sizes)
    ref = fcnet_ref(params, x)

    # --- default path: bf16 MXU inputs, f32 accumulation + f32 epilogue ---
    pp_bf16, dims, dims_p = pad_fcnet_params(
        params, layer_sizes[0], compute_dtype=jnp.bfloat16
    )
    out_bf16 = jax.block_until_ready(
        fcnet_forward(pp_bf16, dims, dims_p, x, compute_dtype=jnp.bfloat16)
    )
    assert out_bf16.shape == (batch, layer_sizes[-1])
    assert jnp.allclose(out_bf16, ref, atol=1.5e-1, rtol=5e-2), \
        "bf16 path mismatch vs reference"

    # --- f32 MXU path (same default MXU precision as the jnp reference) ---
    pp_f32, dims, dims_p = pad_fcnet_params(
        params, layer_sizes[0], compute_dtype=jnp.float32
    )
    out_f32 = jax.block_until_ready(
        fcnet_forward(pp_f32, dims, dims_p, x, compute_dtype=jnp.float32)
    )
    assert jnp.allclose(out_f32, ref, atol=1e-5, rtol=1e-5), \
        "f32 path mismatch vs reference"

    # --- multi-tile / padded-batch / megacore path (B=200 -> 2 grid steps) ---
    batch2 = 200
    key, xk2 = jax.random.split(key)
    x2 = jax.random.normal(xk2, (batch2, layer_sizes[0]), dtype=jnp.float32)
    out2 = jax.block_until_ready(
        fcnet_forward(pp_f32, dims, dims_p, x2, compute_dtype=jnp.float32)
    )
    assert out2.shape == (batch2, layer_sizes[-1])
    assert jnp.allclose(out2, fcnet_ref(params, x2), atol=1e-5, rtol=1e-5), \
        "tiled path mismatch vs reference"

    print("KERNEL_OK")
</pallas_src>

<mosaic_0001>
module attributes {stable_mosaic.version = 11 : i64} {
  func.func @_fcnet_fused_kernel(%arg0: i32, %arg1: memref<8x32xbf16, #tpu.memory_space<vmem>>, %arg2: memref<32x128xbf16, #tpu.memory_space<vmem>>, %arg3: memref<1x128xf32, #tpu.memory_space<vmem>>, %arg4: memref<128x128xbf16, #tpu.memory_space<vmem>>, %arg5: memref<1x128xf32, #tpu.memory_space<vmem>>, %arg6: memref<128x128xbf16, #tpu.memory_space<vmem>>, %arg7: memref<1x128xf32, #tpu.memory_space<vmem>>, %arg8: memref<8x128xf32, #tpu.memory_space<vmem>>) attributes {dimension_semantics = [#tpu.dimension_semantics<parallel>], iteration_bounds = array<i64: 1>, scalar_prefetch = 0 : i64, scratch_operands = 0 : i64, tpu.core_type = #tpu.core_type<tc>, window_params = [{transform_indices = @transform_0, window_bounds = array<i64: 8, 32>}, {pipeline_mode = #tpu.pipeline_mode<synchronous>, transform_indices = @transform_1, window_bounds = array<i64: 32, 128>}, {pipeline_mode = #tpu.pipeline_mode<synchronous>, transform_indices = @transform_2, window_bounds = array<i64: 1, 128>}, {pipeline_mode = #tpu.pipeline_mode<synchronous>, transform_indices = @transform_3, window_bounds = array<i64: 128, 128>}, {pipeline_mode = #tpu.pipeline_mode<synchronous>, transform_indices = @transform_4, window_bounds = array<i64: 1, 128>}, {pipeline_mode = #tpu.pipeline_mode<synchronous>, transform_indices = @transform_5, window_bounds = array<i64: 128, 128>}, {pipeline_mode = #tpu.pipeline_mode<synchronous>, transform_indices = @transform_6, window_bounds = array<i64: 1, 128>}, {transform_indices = @transform_7, window_bounds = array<i64: 8, 128>}]} {
    %c0 = arith.constant 0 : index
    %c0_0 = arith.constant 0 : index
    %0 = vector.load %arg1[%c0, %c0_0] : memref<8x32xbf16, #tpu.memory_space<vmem>>, vector<8x32xbf16>
    %c0_1 = arith.constant 0 : index
    %c0_2 = arith.constant 0 : index
    %1 = vector.load %arg2[%c0_1, %c0_2] : memref<32x128xbf16, #tpu.memory_space<vmem>>, vector<32x128xbf16>
    %cst = arith.constant dense<0.000000e+00> : vector<8x128xf32>
    %2 = tpu.matmul %0, %1, %cst {dimension_numbers = #tpu.dot_dimension_numbers<[1], [0], [0], [1], [0, 0, 1, 1], [], []>} : vector<8x32xbf16>, vector<32x128xbf16>, vector<8x128xf32> -> vector<8x128xf32>
    %c0_3 = arith.constant 0 : index
    %c0_4 = arith.constant 0 : index
    %3 = vector.load %arg3[%c0_3, %c0_4] : memref<1x128xf32, #tpu.memory_space<vmem>>, vector<1x128xf32>
    %4 = vector.broadcast %3 : vector<1x128xf32> to vector<8x128xf32>
    %5 = arith.addf %2, %4 : vector<8x128xf32>
    %cst_5 = arith.constant 0.000000e+00 : f32
    %6 = vector.broadcast %cst_5 : f32 to vector<8x128xf32>
    %7 = arith.maximumf %5, %6 : vector<8x128xf32>
    %8 = arith.truncf %7 : vector<8x128xf32> to vector<8x128xbf16>
    %c0_6 = arith.constant 0 : index
    %c0_7 = arith.constant 0 : index
    %9 = vector.load %arg4[%c0_6, %c0_7] : memref<128x128xbf16, #tpu.memory_space<vmem>>, vector<128x128xbf16>
    %cst_8 = arith.constant dense<0.000000e+00> : vector<8x128xf32>
    %10 = tpu.matmul %8, %9, %cst_8 {dimension_numbers = #tpu.dot_dimension_numbers<[1], [0], [0], [1], [0, 0, 1, 1], [], []>} : vector<8x128xbf16>, vector<128x128xbf16>, vector<8x128xf32> -> vector<8x128xf32>
    %c0_9 = arith.constant 0 : index
    %c0_10 = arith.constant 0 : index
    %11 = vector.load %arg5[%c0_9, %c0_10] : memref<1x128xf32, #tpu.memory_space<vmem>>, vector<1x128xf32>
    %12 = vector.broadcast %11 : vector<1x128xf32> to vector<8x128xf32>
    %13 = arith.addf %10, %12 : vector<8x128xf32>
    %cst_11 = arith.constant 0.000000e+00 : f32
    %14 = vector.broadcast %cst_11 : f32 to vector<8x128xf32>
    %15 = arith.maximumf %13, %14 : vector<8x128xf32>
    %16 = arith.truncf %15 : vector<8x128xf32> to vector<8x128xbf16>
    %c0_12 = arith.constant 0 : index
    %c0_13 = arith.constant 0 : index
    %17 = vector.load %arg6[%c0_12, %c0_13] : memref<128x128xbf16, #tpu.memory_space<vmem>>, vector<128x128xbf16>
    %cst_14 = arith.constant dense<0.000000e+00> : vector<8x128xf32>
    %18 = tpu.matmul %16, %17, %cst_14 {dimension_numbers = #tpu.dot_dimension_numbers<[1], [0], [0], [1], [0, 0, 1, 1], [], []>} : vector<8x128xbf16>, vector<128x128xbf16>, vector<8x128xf32> -> vector<8x128xf32>
    %c0_15 = arith.constant 0 : index
    %c0_16 = arith.constant 0 : index
    %19 = vector.load %arg7[%c0_15, %c0_16] : memref<1x128xf32, #tpu.memory_space<vmem>>, vector<1x128xf32>
    %20 = vector.broadcast %19 : vector<1x128xf32> to vector<8x128xf32>
    %21 = arith.addf %18, %20 : vector<8x128xf32>
    %c0_17 = arith.constant 0 : index
    %c0_18 = arith.constant 0 : index
    %22 = vector.load %arg8[%c0_17, %c0_18] : memref<8x128xf32, #tpu.memory_space<vmem>>, vector<8x128xf32>
    tpu.vector_store %arg8[%c0_17, %c0_18], %21 {strides = array<i32>} : memref<8x128xf32, #tpu.memory_space<vmem>>, vector<8x128xf32>,
    return
  }
  func.func @transform_0(%arg0: i32) -> (i32, i32) {
    %c0_i32 = arith.constant 0 : i32
    %c0_i32_0 = arith.constant 0 : i32
    return %arg0, %c0_i32 : i32, i32
  }
  func.func @transform_1(%arg0: i32) -> (i32, i32) {
    %c0_i32 = arith.constant 0 : i32
    %c0_i32_0 = arith.constant 0 : i32
    %c0_i32_1 = arith.constant 0 : i32
    return %c0_i32, %c0_i32_0 : i32, i32
  }
  func.func @transform_2(%arg0: i32) -> (i32, i32) {
    %c0_i32 = arith.constant 0 : i32
    %c0_i32_0 = arith.constant 0 : i32
    %c0_i32_1 = arith.constant 0 : i32
    return %c0_i32, %c0_i32_0 : i32, i32
  }
  func.func @transform_3(%arg0: i32) -> (i32, i32) {
    %c0_i32 = arith.constant 0 : i32
    %c0_i32_0 = arith.constant 0 : i32
    %c0_i32_1 = arith.constant 0 : i32
    return %c0_i32, %c0_i32_0 : i32, i32
  }
  func.func @transform_4(%arg0: i32) -> (i32, i32) {
    %c0_i32 = arith.constant 0 : i32
    %c0_i32_0 = arith.constant 0 : i32
    %c0_i32_1 = arith.constant 0 : i32
    return %c0_i32, %c0_i32_0 : i32, i32
  }
  func.func @transform_5(%arg0: i32) -> (i32, i32) {
    %c0_i32 = arith.constant 0 : i32
    %c0_i32_0 = arith.constant 0 : i32
    %c0_i32_1 = arith.constant 0 : i32
    return %c0_i32, %c0_i32_0 : i32, i32
  }
  func.func @transform_6(%arg0: i32) -> (i32, i32) {
    %c0_i32 = arith.constant 0 : i32
    %c0_i32_0 = arith.constant 0 : i32
    %c0_i32_1 = arith.constant 0 : i32
    return %c0_i32, %c0_i32_0 : i32, i32
  }
  func.func @transform_7(%arg0: i32) -> (i32, i32) {
    %c0_i32 = arith.constant 0 : i32
    %c0_i32_0 = arith.constant 0 : i32
    return %arg0, %c0_i32 : i32, i32
  }
}

module attributes {stable_mosaic.version = 11 : i64} {
  func.func @_fcnet_fused_kernel(%arg0: i32, %arg1: memref<8x32xbf16, #tpu.memory_space<vmem>>, %arg2: memref<32x128xbf16, #tpu.memory_space<vmem>>, %arg3: memref<1x128xf32, #tpu.memory_space<vmem>>, %arg4: memref<128x128xbf16, #tpu.memory_space<vmem>>, %arg5: memref<1x128xf32, #tpu.memory_space<vmem>>, %arg6: memref<128x128xbf16, #tpu.memory_space<vmem>>, %arg7: memref<1x128xf32, #tpu.memory_space<vmem>>, %arg8: memref<8x128xf32, #tpu.memory_space<vmem>>) attributes {dimension_semantics = [#tpu.dimension_semantics<parallel>], iteration_bounds = array<i64: 1>, scalar_prefetch = 0 : i64, scratch_operands = 0 : i64, tpu.core_type = #tpu.core_type<tc>, window_params = [{transform_indices = @transform_0, window_bounds = array<i64: 8, 32>}, {pipeline_mode = #tpu.pipeline_mode<synchronous>, transform_indices = @transform_1, window_bounds = array<i64: 32, 128>}, {pipeline_mode = #tpu.pipeline_mode<synchronous>, transform_indices = @transform_2, window_bounds = array<i64: 1, 128>}, {pipeline_mode = #tpu.pipeline_mode<synchronous>, transform_indices = @transform_3, window_bounds = array<i64: 128, 128>}, {pipeline_mode = #tpu.pipeline_mode<synchronous>, transform_indices = @transform_4, window_bounds = array<i64: 1, 128>}, {pipeline_mode = #tpu.pipeline_mode<synchronous>, transform_indices = @transform_5, window_bounds = array<i64: 128, 128>}, {pipeline_mode = #tpu.pipeline_mode<synchronous>, transform_indices = @transform_6, window_bounds = array<i64: 1, 128>}, {transform_indices = @transform_7, window_bounds = array<i64: 8, 128>}]} {
    %c0 = arith.constant 0 : index
    %c0_0 = arith.constant 0 : index
    %0 = vector.load %arg1[%c0, %c0_0] : memref<8x32xbf16, #tpu.memory_space<vmem>>, vector<8x32xbf16>
    %c0_1 = arith.constant 0 : index
    %c0_2 = arith.constant 0 : index
    %1 = vector.load %arg2[%c0_1, %c0_2] : memref<32x128xbf16, #tpu.memory_space<vmem>>, vector<32x128xbf16>
    %cst = arith.constant dense<0.000000e+00> : vector<8x128xf32>
    %2 = tpu.matmul %0, %1, %cst {dimension_numbers = #tpu.dot_dimension_numbers<[1], [0], [0], [1], [0, 0, 1, 1], [], []>} : vector<8x32xbf16>, vector<32x128xbf16>, vector<8x128xf32> -> vector<8x128xf32>
    %c0_3 = arith.constant 0 : index
    %c0_4 = arith.constant 0 : index
    %3 = vector.load %arg3[%c0_3, %c0_4] : memref<1x128xf32, #tpu.memory_space<vmem>>, vector<1x128xf32>
    %4 = vector.broadcast %3 : vector<1x128xf32> to vector<8x128xf32>
    %5 = arith.addf %2, %4 : vector<8x128xf32>
    %cst_5 = arith.constant 0.000000e+00 : f32
    %6 = vector.broadcast %cst_5 : f32 to vector<8x128xf32>
    %7 = arith.maximumf %5, %6 : vector<8x128xf32>
    %8 = arith.truncf %7 : vector<8x128xf32> to vector<8x128xbf16>
    %c0_6 = arith.constant 0 : index
    %c0_7 = arith.constant 0 : index
    %9 = vector.load %arg4[%c0_6, %c0_7] : memref<128x128xbf16, #tpu.memory_space<vmem>>, vector<128x128xbf16>
    %cst_8 = arith.constant dense<0.000000e+00> : vector<8x128xf32>
    %10 = tpu.matmul %8, %9, %cst_8 {dimension_numbers = #tpu.dot_dimension_numbers<[1], [0], [0], [1], [0, 0, 1, 1], [], []>} : vector<8x128xbf16>, vector<128x128xbf16>, vector<8x128xf32> -> vector<8x128xf32>
    %c0_9 = arith.constant 0 : index
    %c0_10 = arith.constant 0 : index
    %11 = vector.load %arg5[%c0_9, %c0_10] : memref<1x128xf32, #tpu.memory_space<vmem>>, vector<1x128xf32>
    %12 = vector.broadcast %11 : vector<1x128xf32> to vector<8x128xf32>
    %13 = arith.addf %10, %12 : vector<8x128xf32>
    %cst_11 = arith.constant 0.000000e+00 : f32
    %14 = vector.broadcast %cst_11 : f32 to vector<8x128xf32>
    %15 = arith.maximumf %13, %14 : vector<8x128xf32>
    %16 = arith.truncf %15 : vector<8x128xf32> to vector<8x128xbf16>
    %c0_12 = arith.constant 0 : index
    %c0_13 = arith.constant 0 : index
    %17 = vector.load %arg6[%c0_12, %c0_13] : memref<128x128xbf16, #tpu.memory_space<vmem>>, vector<128x128xbf16>
    %cst_14 = arith.constant dense<0.000000e+00> : vector<8x128xf32>
    %18 = tpu.matmul %16, %17, %cst_14 {dimension_numbers = #tpu.dot_dimension_numbers<[1], [0], [0], [1], [0, 0, 1, 1], [], []>} : vector<8x128xbf16>, vector<128x128xbf16>, vector<8x128xf32> -> vector<8x128xf32>
    %c0_15 = arith.constant 0 : index
    %c0_16 = arith.constant 0 : index
    %19 = vector.load %arg7[%c0_15, %c0_16] : memref<1x128xf32, #tpu.memory_space<vmem>>, vector<1x128xf32>
    %20 = vector.broadcast %19 : vector<1x128xf32> to vector<8x128xf32>
    %21 = arith.addf %18, %20 : vector<8x128xf32>
    %c0_17 = arith.constant 0 : index
    %c0_18 = arith.constant 0 : index
    %22 = vector.load %arg8[%c0_17, %c0_18] : memref<8x128xf32, #tpu.memory_space<vmem>>, vector<8x128xf32>
    tpu.vector_store %arg8[%c0_17, %c0_18], %21 {strides = array<i32>} : memref<8x128xf32, #tpu.memory_space<vmem>>, vector<8x128xf32>,
    return
  }
  func.func @transform_0(%arg0: i32) -> (i32, i32) {
    %c0_i32 = arith.constant 0 : i32
    %c0_i32_0 = arith.constant 0 : i32
    return %arg0, %c0_i32 : i32, i32
  }
  func.func @transform_1(%arg0: i32) -> (i32, i32) {
    %c0_i32 = arith.constant 0 : i32
    %c0_i32_0 = arith.constant 0 : i32
    %c0_i32_1 = arith.constant 0 : i32
    return %c0_i32, %c0_i32_0 : i32, i32
  }
  func.func @transform_2(%arg0: i32) -> (i32, i32) {
    %c0_i32 = arith.constant 0 : i32
    %c0_i32_0 = arith.constant 0 : i32
    %c0_i32_1 = arith.constant 0 : i32
    return %c0_i32, %c0_i32_0 : i32, i32
  }
  func.func @transform_3(%arg0: i32) -> (i32, i32) {
    %c0_i32 = arith.constant 0 : i32
    %c0_i32_0 = arith.constant 0 : i32
    %c0_i32_1 = arith.constant 0 : i32
    return %c0_i32, %c0_i32_0 : i32, i32
  }
  func.func @transform_4(%arg0: i32) -> (i32, i32) {
    %c0_i32 = arith.constant 0 : i32
    %c0_i32_0 = arith.constant 0 : i32
    %c0_i32_1 = arith.constant 0 : i32
    return %c0_i32, %c0_i32_0 : i32, i32
  }
  func.func @transform_5(%arg0: i32) -> (i32, i32) {
    %c0_i32 = arith.constant 0 : i32
    %c0_i32_0 = arith.constant 0 : i32
    %c0_i32_1 = arith.constant 0 : i32
    return %c0_i32, %c0_i32_0 : i32, i32
  }
  func.func @transform_6(%arg0: i32) -> (i32, i32) {
    %c0_i32 = arith.constant 0 : i32
    %c0_i32_0 = arith.constant 0 : i32
    %c0_i32_1 = arith.constant 0 : i32
    return %c0_i32, %c0_i32_0 : i32, i32
  }
  func.func @transform_7(%arg0: i32) -> (i32, i32) {
    %c0_i32 = arith.constant 0 : i32
    %c0_i32_0 = arith.constant 0 : i32
    return %arg0, %c0_i32 : i32, i32
  }
}

</mosaic_0001>

<llo_original>
// kernel: tpu_custom_call.1
$region0: #{tpu_custom_call.1}
  #allocation0 [shape = 'u32[]', space=smem, size = 0x4, offset = 0x4, fixed_abs, tag = 'smem constant byte address 0x4 - core index']
  #allocation1 [shape = 'u32[144,128]{1,0:T(1,128)}', space=vmem, size = 0x12000, scoped, tag = 'internal scratch']
  %s0 = inlined_call_operand.hbm [shape: bf16[8,32], index: 0, kind: input, shape index: {}]
  %s1 = inlined_call_operand.hbm [shape: bf16[32,128], index: 1, kind: input, shape index: {}]
  %s2 = inlined_call_operand.vmem [shape: f32[1,128], index: 2, kind: input, shape index: {}]
  %s3 = inlined_call_operand.hbm [shape: bf16[128,128], index: 3, kind: input, shape index: {}]
  %s4 = inlined_call_operand.vmem [shape: f32[1,128], index: 4, kind: input, shape index: {}]
  %s5 = inlined_call_operand.hbm [shape: bf16[128,128], index: 5, kind: input, shape index: {}]
  %s6 = inlined_call_operand.vmem [shape: f32[1,128], index: 6, kind: input, shape index: {}]
  %s7 = inlined_call_operand.hbm [shape: f32[8,128], index: 7, kind: output, shape index: {}]
  %s8 = sld [smem:[#allocation0]]
  $region54: #{tpu_custom_call.1} parent=0
    _
  %s10 = ssub.s32 1, %s8
  %s11 = scalar_select 0, %s10, %s8
  $region1: #{tpu_custom_call.1} parent=0
    #allocation2 [shape = 'u8[2048]{0}', space=vmem, size = 0x800, scoped, tag = 'input window, operand 0, single buffered']
    #allocation3 [shape = 's32[1]{0}', space=sflag, size = 0x4, scoped, tag = 'scoped memory for tpu_custom_call.1']
    #allocation4 [shape = 's32[1]{0}', space=sflag, size = 0x4, scoped, tag = 'scoped memory for tpu_custom_call.1']
    #allocation5 [shape = 'u8[8192]{0}', space=vmem, size = 0x2000, scoped, tag = 'input window, operand 1, single buffered']
    #allocation6 [shape = 's32[1]{0}', space=sflag, size = 0x4, scoped, tag = 'scoped memory for tpu_custom_call.1']
    #allocation7 [shape = 'u8[32768]{0}', space=vmem, size = 0x8000, scoped, tag = 'input window, operand 3, single buffered']
    #allocation8 [shape = 'u8[32768]{0}', space=vmem, size = 0x8000, scoped, tag = 'input window, operand 5, single buffered']
    #allocation9 [shape = 's32[1]{0}', space=sflag, size = 0x4, scoped, tag = 'scoped memory for tpu_custom_call.1']
    #allocation10 [shape = 'u8[4096]{0}', space=vmem, size = 0x1000, scoped, tag = 'output window, operand 0, single buffered']
    %12 = vsyncpa [#allocation3], 0
    %13 = vsyncpa [#allocation6], 0
    %14 = vsyncpa [#allocation9], 0
    %15 = vsyncpa [#allocation4], 0
    // Predicated region
    $region2: #{tpu_custom_call.1} parent=1 // pred_check
      _
    $region3: #{tpu_custom_call.1} parent=1 // pred_check_branch
      %17 = sbr.rel (0) target = $region5
    $region4: #{tpu_custom_call.1} parent=1 // pred_region
      %s19 = ssub.s32 64, 64
      %20 = vsyncadd [#allocation3], %s19
      %s22 = sshll.u32 [#allocation2], 4
      %s23 = int_to_ptr.vmem [resolvable:$true] %s22
      %25 = dma.hbm_to_vmem [thread:$0]  %s0, 64, %s23, [#allocation3]
    $region5: #{tpu_custom_call.1} parent=1 // pred_fallthru
      _
    // Predicated region
    $region6: #{tpu_custom_call.1} parent=1 // pred_check
      _
    $region7: #{tpu_custom_call.1} parent=1 // pred_check_branch
      %27 = sbr.rel (0) target = $region9
    $region8: #{tpu_custom_call.1} parent=1 // pred_region
      %s29 = ssub.s32 256, 256
      %30 = vsyncadd [#allocation6], %s29
      %s31 = sshll.u32 [#allocation5], 4
      %s32 = int_to_ptr.vmem [resolvable:$true] %s31
      %37 = dma.hbm_to_vmem [thread:$0]  %s1, 256, %s32, [#allocation6], 64, 64, 4
    $region9: #{tpu_custom_call.1} parent=1 // pred_fallthru
      _
    // Predicated region
    $region10: #{tpu_custom_call.1} parent=1 // pred_check
      _
    $region11: #{tpu_custom_call.1} parent=1 // pred_check_branch
      %39 = sbr.rel (0) target = $region13
    $region12: #{tpu_custom_call.1} parent=1 // pred_region
      _
    $region13: #{tpu_custom_call.1} parent=1 // pred_fallthru
      _
    // Predicated region
    $region14: #{tpu_custom_call.1} parent=1 // pred_check
      _
    $region15: #{tpu_custom_call.1} parent=1 // pred_check_branch
      %41 = sbr.rel (0) target = $region17
    $region16: #{tpu_custom_call.1} parent=1 // pred_region
      %s43 = ssub.s32 1024, 1024
      %44 = vsyncadd [#allocation6], %s43
      %s45 = sshll.u32 [#allocation7], 4
      %s46 = int_to_ptr.vmem [resolvable:$true] %s45
      %51 = dma.hbm_to_vmem [thread:$0]  %s3, 1024, %s46, [#allocation6], 64, 64, 4
    $region17: #{tpu_custom_call.1} parent=1 // pred_fallthru
      _
    // Predicated region
    $region18: #{tpu_custom_call.1} parent=1 // pred_check
      _
    $region19: #{tpu_custom_call.1} parent=1 // pred_check_branch
      %53 = sbr.rel (0) target = $region21
    $region20: #{tpu_custom_call.1} parent=1 // pred_region
      _
    $region21: #{tpu_custom_call.1} parent=1 // pred_fallthru
      _
    // Predicated region
    $region22: #{tpu_custom_call.1} parent=1 // pred_check
      _
    $region23: #{tpu_custom_call.1} parent=1 // pred_check_branch
      %55 = sbr.rel (0) target = $region25
    $region24: #{tpu_custom_call.1} parent=1 // pred_region
      %s57 = ssub.s32 1024, 1024
      %58 = vsyncadd [#allocation9], %s57
      %s59 = sshll.u32 [#allocation8], 4
      %s60 = int_to_ptr.vmem [resolvable:$true] %s59
      %65 = dma.hbm_to_vmem [thread:$0]  %s5, 1024, %s60, [#allocation9], 64, 64, 4
    $region25: #{tpu_custom_call.1} parent=1 // pred_fallthru
      _
    // Predicated region
    $region26: #{tpu_custom_call.1} parent=1 // pred_check
      _
    $region27: #{tpu_custom_call.1} parent=1 // pred_check_branch
      %67 = sbr.rel (0) target = $region29
    $region28: #{tpu_custom_call.1} parent=1 // pred_region
      _
    $region29: #{tpu_custom_call.1} parent=1 // pred_fallthru
      _
    // Predicated region
    $region30: #{tpu_custom_call.1} parent=1 // pred_check
      _
    $region31: #{tpu_custom_call.1} parent=1 // pred_check_branch
      %69 = sbr.rel (0) target = $region33
    $region32: #{tpu_custom_call.1} parent=1 // pred_region
      %70 = dma.done [#allocation3], 64
    $region33: #{tpu_custom_call.1} parent=1 // pred_fallthru
      _
    // Predicated region
    $region34: #{tpu_custom_call.1} parent=1 // pred_check
      _
    $region35: #{tpu_custom_call.1} parent=1 // pred_check_branch
      %72 = sbr.rel (0) target = $region37
    $region36: #{tpu_custom_call.1} parent=1 // pred_region
      %73 = dma.done [#allocation6], 256
    $region37: #{tpu_custom_call.1} parent=1 // pred_fallthru
      _
    // Predicated region
    $region38: #{tpu_custom_call.1} parent=1 // pred_check
      _
    $region39: #{tpu_custom_call.1} parent=1 // pred_check_branch
      %75 = sbr.rel (0) target = $region41
    $region40: #{tpu_custom_call.1} parent=1 // pred_region
      %76 = dma.done [#allocation6], 1024
    $region41: #{tpu_custom_call.1} parent=1 // pred_fallthru
      _
    // Predicated region
    $region42: #{tpu_custom_call.1} parent=1 // pred_check
      _
    $region43: #{tpu_custom_call.1} parent=1 // pred_check_branch
      %78 = sbr.rel (0) target = $region45
    $region44: #{tpu_custom_call.1} parent=1 // pred_region
      %79 = dma.done [#allocation9], 1024
    $region45: #{tpu_custom_call.1} parent=1 // pred_fallthru
      _
    %v81 = vld [vmem:[#allocation2] sm:$0xf]
    %v82 = vld [vmem:[#allocation5] sm:$0xf]
    %v83 = vld [vmem:[#allocation5 + $0x4] sm:$0xf]
    %v84 = vld [vmem:[#allocation5 + $0x8] sm:$0xf]
    %v85 = vld [vmem:[#allocation5 + $0xc] sm:$0xf]
    %v86 = vld [vmem:[%s2] sm:$0x1]
    %v88 = vlaneseq
    %v89 = vshrl.u32 %v88, 7
    %v90 = vsub.s32 0, %v89
    %v91 = vrot.slane %v86, %v90
    %v97 = vunpack.c.l.b16 %v82
    %v98 = vunpack.c.l.b16 %v83
    %v99 = vunpack.c.l.b16 %v84
    %v100 = vunpack.c.l.b16 %v85
    %v101 = vpack.c.b16 %v98, %v97
    %v102 = vpack.c.b16 %v100, %v99
    %vm105 = vcmask 261120
    %v107 = vsel %vm105, %v81, 0
    %109 = vmatprep.subr.bf16.mxu0 0
    %110 = vmatpush1.bf16.msra.mxu0 0
    %111 = vmatprep.subr.bf16.mxu0 0
    %112 = vmatpush1.bf16.msra.mxu0 0
    %113 = vmatprep.subr.bf16.mxu0 0
    %114 = vmatpush1.bf16.msra.mxu0 0
    %115 = vmatprep.subr.bf16.mxu0 0
    %116 = vmatpush1.bf16.msra.mxu0 0
    %117 = vmatprep.subr.bf16.mxu0 0
    %118 = vmatpush1.bf16.msra.mxu0 0
    %119 = vmatprep.subr.bf16.mxu0 0
    %120 = vmatpush1.bf16.msra.mxu0 0
    %121 = vmatprep.subr.bf16.mxu0 0
    %122 = vmatpush1.bf16.msra.mxu0 %v102
    %123 = vmatprep.subr.bf16.mxu0 0
    %124 = vmatpush1.bf16.msra.mxu0 %v101
    %125 = vmatprep.subr.bf16.mxu0 0
    %126 = vmatpush2.bf16.msra.mxu0 0
    %127 = vmatprep.subr.bf16.mxu0 0
    %128 = vmatpush2.bf16.msra.mxu0 0
    %129 = vmatprep.subr.bf16.mxu0 0
    %130 = vmatpush2.bf16.msra.mxu0 0
    %131 = vmatprep.subr.bf16.mxu0 0
    %132 = vmatpush2.bf16.msra.mxu0 0
    %133 = vmatprep.subr.bf16.mxu0 0
    %134 = vmatpush2.bf16.msra.mxu0 0
    %135 = vmatprep.subr.bf16.mxu0 0
    %136 = vmatpush2.bf16.msra.mxu0 0
    %137 = vmatprep.subr.bf16.mxu0 0
    %138 = vmatpush2.bf16.msra.mxu0 0
    %139 = vmatprep.subr.bf16.mxu0 0
    %140 = vmatpush2.bf16.msra.mxu0 0
    %141 = vmatprep.mubr.bf16.mxu0 0
    %142 = vmatmul.mubr.bf16.gmra.mxu0 %v107
    %v143 = vpop.f32.mrf.mxu0
    %v144 = vadd.f32 %v91, %v143
    %v145 = vpop.f32.mrf.mxu0
    %v146 = vpop.f32.mrf.mxu0
    %v147 = vpop.f32.mrf.mxu0
    %148 = vdwg.mxu0
    %v149 = vmax.f32 %v144, 0.0
    %v150 = vpack.c.bf16 %v149, %v149
    %v151 = vld [vmem:[#allocation7] sm:$0xf]
    %v152 = vld [vmem:[#allocation7 + $0x4] sm:$0xf]
    %v153 = vld [vmem:[#allocation7 + $0x8] sm:$0xf]
    %v154 = vld [vmem:[#allocation7 + $0xc] sm:$0xf]
    %v155 = vld [vmem:[#allocation7 + $0x10] sm:$0xf]
    %v156 = vld [vmem:[#allocation7 + $0x14] sm:$0xf]
    %v157 = vld [vmem:[#allocation7 + $0x18] sm:$0xf]
    %v158 = vld [vmem:[#allocation7 + $0x1c] sm:$0xf]
    %v159 = vld [vmem:[#allocation7 + $0x20] sm:$0xf]
    %v160 = vld [vmem:[#allocation7 + $0x24] sm:$0xf]
    %v161 = vld [vmem:[#allocation7 + $0x28] sm:$0xf]
    %v162 = vld [vmem:[#allocation7 + $0x2c] sm:$0xf]
    %v163 = vld [vmem:[#allocation7 + $0x30] sm:$0xf]
    %v164 = vld [vmem:[#allocation7 + $0x34] sm:$0xf]
    %v165 = vld [vmem:[#allocation7 + $0x38] sm:$0xf]
    %v166 = vld [vmem:[#allocation7 + $0x3c] sm:$0xf]
    %v167 = vld [vmem:[%s4] sm:$0x1]
    %v169 = vlaneseq
    %v170 = vshrl.u32 %v169, 7
    %v171 = vsub.s32 0, %v170
    %v172 = vrot.slane %v167, %v171
    %v190 = vunpack.c.l.b16 %v151
    %v191 = vunpack.c.l.b16 %v152
    %v192 = vunpack.c.l.b16 %v153
    %v193 = vunpack.c.l.b16 %v154
    %v194 = vunpack.c.l.b16 %v155
    %v195 = vunpack.c.l.b16 %v156
    %v196 = vunpack.c.l.b16 %v157
    %v197 = vunpack.c.l.b16 %v158
    %v198 = vunpack.c.l.b16 %v159
    %v199 = vunpack.c.l.b16 %v160
    %v200 = vunpack.c.l.b16 %v161
    %v201 = vunpack.c.l.b16 %v162
    %v202 = vunpack.c.l.b16 %v163
    %v203 = vunpack.c.l.b16 %v164
    %v204 = vunpack.c.l.b16 %v165
    %v205 = vunpack.c.l.b16 %v166
    %v206 = vpack.c.b16 %v191, %v190
    %v207 = vpack.c.b16 %v193, %v192
    %v208 = vpack.c.b16 %v195, %v194
    %v209 = vpack.c.b16 %v197, %v196
    %v210 = vpack.c.b16 %v199, %v198
    %v211 = vpack.c.b16 %v201, %v200
    %v212 = vpack.c.b16 %v203, %v202
    %v213 = vpack.c.b16 %v205, %v204
    %222 = vmatprep.subr.bf16.mxu0 0
    %223 = vmatpush1.bf16.msra.mxu0 %v213
    %224 = vmatprep.subr.bf16.mxu0 0
    %225 = vmatpush1.bf16.msra.mxu0 %v212
    %226 = vmatprep.subr.bf16.mxu0 0
    %227 = vmatpush1.bf16.msra.mxu0 %v211
    %228 = vmatprep.subr.bf16.mxu0 0
    %229 = vmatpush1.bf16.msra.mxu0 %v210
    %230 = vmatprep.subr.bf16.mxu0 0
    %231 = vmatpush1.bf16.msra.mxu0 %v209
    %232 = vmatprep.subr.bf16.mxu0 0
    %233 = vmatpush1.bf16.msra.mxu0 %v208
    %234 = vmatprep.subr.bf16.mxu0 0
    %235 = vmatpush1.bf16.msra.mxu0 %v207
    %236 = vmatprep.subr.bf16.mxu0 0
    %237 = vmatpush1.bf16.msra.mxu0 %v206
    %238 = vmatprep.subr.bf16.mxu0 0
    %239 = vmatpush2.bf16.msra.mxu0 0
    %240 = vmatprep.subr.bf16.mxu0 0
    %241 = vmatpush2.bf16.msra.mxu0 0
    %242 = vmatprep.subr.bf16.mxu0 0
    %243 = vmatpush2.bf16.msra.mxu0 0
    %244 = vmatprep.subr.bf16.mxu0 0
    %245 = vmatpush2.bf16.msra.mxu0 0
    %246 = vmatprep.subr.bf16.mxu0 0
    %247 = vmatpush2.bf16.msra.mxu0 0
    %248 = vmatprep.subr.bf16.mxu0 0
    %249 = vmatpush2.bf16.msra.mxu0 0
    %250 = vmatprep.subr.bf16.mxu0 0
    %251 = vmatpush2.bf16.msra.mxu0 0
    %252 = vmatprep.subr.bf16.mxu0 0
    %253 = vmatpush2.bf16.msra.mxu0 0
    %254 = vmatprep.mubr.bf16.mxu0 0
    %255 = vmatmul.mubr.bf16.gmra.mxu0 %v150
    %v256 = vpop.f32.mrf.mxu0
    %v257 = vadd.f32 %v172, %v256
    %v258 = vpop.f32.mrf.mxu0
    %v259 = vpop.f32.mrf.mxu0
    %v260 = vpop.f32.mrf.mxu0
    %261 = vdwg.mxu0
    %v262 = vmax.f32 %v257, 0.0
    %v263 = vpack.c.bf16 %v262, %v262
    %v264 = vld [vmem:[#allocation8] sm:$0xf]
    %v265 = vld [vmem:[#allocation8 + $0x4] sm:$0xf]
    %v266 = vld [vmem:[#allocation8 + $0x8] sm:$0xf]
    %v267 = vld [vmem:[#allocation8 + $0xc] sm:$0xf]
    %v268 = vld [vmem:[#allocation8 + $0x10] sm:$0xf]
    %v269 = vld [vmem:[#allocation8 + $0x14] sm:$0xf]
    %v270 = vld [vmem:[#allocation8 + $0x18] sm:$0xf]
    %v271 = vld [vmem:[#allocation8 + $0x1c] sm:$0xf]
    %v272 = vld [vmem:[#allocation8 + $0x20] sm:$0xf]
    %v273 = vld [vmem:[#allocation8 + $0x24] sm:$0xf]
    %v274 = vld [vmem:[#allocation8 + $0x28] sm:$0xf]
    %v275 = vld [vmem:[#allocation8 + $0x2c] sm:$0xf]
    %v276 = vld [vmem:[#allocation8 + $0x30] sm:$0xf]
    %v277 = vld [vmem:[#allocation8 + $0x34] sm:$0xf]
    %v278 = vld [vmem:[#allocation8 + $0x38] sm:$0xf]
    %v279 = vld [vmem:[#allocation8 + $0x3c] sm:$0xf]
    %v280 = vld [vmem:[%s6] sm:$0x1]
    %v282 = vlaneseq
    %v283 = vshrl.u32 %v282, 7
    %v284 = vsub.s32 0, %v283
    %v285 = vrot.slane %v280, %v284
    %v303 = vunpack.c.l.b16 %v264
    %v304 = vunpack.c.l.b16 %v265
    %v305 = vunpack.c.l.b16 %v266
    %v306 = vunpack.c.l.b16 %v267
    %v307 = vunpack.c.l.b16 %v268
    %v308 = vunpack.c.l.b16 %v269
    %v309 = vunpack.c.l.b16 %v270
    %v310 = vunpack.c.l.b16 %v271
    %v311 = vunpack.c.l.b16 %v272
    %v312 = vunpack.c.l.b16 %v273
    %v313 = vunpack.c.l.b16 %v274
    %v314 = vunpack.c.l.b16 %v275
    %v315 = vunpack.c.l.b16 %v276
    %v316 = vunpack.c.l.b16 %v277
    %v317 = vunpack.c.l.b16 %v278
    %v318 = vunpack.c.l.b16 %v279
    %v319 = vpack.c.b16 %v304, %v303
    %v320 = vpack.c.b16 %v306, %v305
    %v321 = vpack.c.b16 %v308, %v307
    %v322 = vpack.c.b16 %v310, %v309
    %v323 = vpack.c.b16 %v312, %v311
    %v324 = vpack.c.b16 %v314, %v313
    %v325 = vpack.c.b16 %v316, %v315
    %v326 = vpack.c.b16 %v318, %v317
    %335 = vmatprep.subr.bf16.mxu0 0
    %336 = vmatpush1.bf16.msra.mxu0 %v326
    %337 = vmatprep.subr.bf16.mxu0 0
    %338 = vmatpush1.bf16.msra.mxu0 %v325
    %339 = vmatprep.subr.bf16.mxu0 0
    %340 = vmatpush1.bf16.msra.mxu0 %v324
    %341 = vmatprep.subr.bf16.mxu0 0
    %342 = vmatpush1.bf16.msra.mxu0 %v323
    %343 = vmatprep.subr.bf16.mxu0 0
    %344 = vmatpush1.bf16.msra.mxu0 %v322
    %345 = vmatprep.subr.bf16.mxu0 0
    %346 = vmatpush1.bf16.msra.mxu0 %v321
    %347 = vmatprep.subr.bf16.mxu0 0
    %348 = vmatpush1.bf16.msra.mxu0 %v320
    %349 = vmatprep.subr.bf16.mxu0 0
    %350 = vmatpush1.bf16.msra.mxu0 %v319
    %351 = vmatprep.subr.bf16.mxu0 0
    %352 = vmatpush2.bf16.msra.mxu0 0
    %353 = vmatprep.subr.bf16.mxu0 0
    %354 = vmatpush2.bf16.msra.mxu0 0
    %355 = vmatprep.subr.bf16.mxu0 0
    %356 = vmatpush2.bf16.msra.mxu0 0
    %357 = vmatprep.subr.bf16.mxu0 0
    %358 = vmatpush2.bf16.msra.mxu0 0
    %359 = vmatprep.subr.bf16.mxu0 0
    %360 = vmatpush2.bf16.msra.mxu0 0
    %361 = vmatprep.subr.bf16.mxu0 0
    %362 = vmatpush2.bf16.msra.mxu0 0
    %363 = vmatprep.subr.bf16.mxu0 0
    %364 = vmatpush2.bf16.msra.mxu0 0
    %365 = vmatprep.subr.bf16.mxu0 0
    %366 = vmatpush2.bf16.msra.mxu0 0
    %367 = vmatprep.mubr.bf16.mxu0 0
    %368 = vmatmul.mubr.bf16.gmra.mxu0 %v263
    %v369 = vpop.f32.mrf.mxu0
    %v370 = vadd.f32 %v285, %v369
    %v371 = vpop.f32.mrf.mxu0
    %v372 = vpop.f32.mrf.mxu0
    %v373 = vpop.f32.mrf.mxu0
    %374 = vdwg.mxu0
    %375 = vst [vmem:[#allocation10] sm:$0xff] %v370
    // Predicated region
    $region46: #{tpu_custom_call.1} parent=1 // pred_check
      _
    $region47: #{tpu_custom_call.1} parent=1 // pred_check_branch
      %377 = sbr.rel (0) target = $region49
    $region48: #{tpu_custom_call.1} parent=1 // pred_region
      %s379 = ssub.s32 128, 128
      %380 = vsyncadd [#allocation4], %s379
      %s382 = sshll.u32 [#allocation10], 4
      %s383 = int_to_ptr.vmem [resolvable:$true] %s382
      %385 = dma.vmem_to_hbm [thread:$0]  %s383, 128, %s7, [#allocation4]
    $region49: #{tpu_custom_call.1} parent=1 // pred_fallthru
      _
    // Predicated region
    $region50: #{tpu_custom_call.1} parent=1 // pred_check
      _
    $region51: #{tpu_custom_call.1} parent=1 // pred_check_branch
      %387 = sbr.rel (0) target = $region53
    $region52: #{tpu_custom_call.1} parent=1 // pred_region
      %388 = dma.done [#allocation4], 128
    $region53: #{tpu_custom_call.1} parent=1 // pred_fallthru
      _
    %389 = vsyncpa [#allocation3], 1
    %390 = vsyncpa [#allocation6], 1
    %391 = vsyncpa [#allocation9], 1
    %392 = vsyncpa [#allocation4], 1

// kernel: tpu_custom_call.1
$region0: #{tpu_custom_call.1}
  #allocation0 [shape = 'u32[]', space=smem, size = 0x4, offset = 0x4, fixed_abs, tag = 'smem constant byte address 0x4 - core index']
  #allocation1 [shape = 'u32[144,128]{1,0:T(1,128)}', space=vmem, size = 0x12000, scoped, tag = 'internal scratch']
  %s0 = inlined_call_operand.hbm [shape: bf16[8,32], index: 0, kind: input, shape index: {}]
  %s1 = inlined_call_operand.hbm [shape: bf16[32,128], index: 1, kind: input, shape index: {}]
  %s2 = inlined_call_operand.vmem [shape: f32[1,128], index: 2, kind: input, shape index: {}]
  %s3 = inlined_call_operand.hbm [shape: bf16[128,128], index: 3, kind: input, shape index: {}]
  %s4 = inlined_call_operand.vmem [shape: f32[1,128], index: 4, kind: input, shape index: {}]
  %s5 = inlined_call_operand.hbm [shape: bf16[128,128], index: 5, kind: input, shape index: {}]
  %s6 = inlined_call_operand.vmem [shape: f32[1,128], index: 6, kind: input, shape index: {}]
  %s7 = inlined_call_operand.hbm [shape: f32[8,128], index: 7, kind: output, shape index: {}]
  %s8 = sld [smem:[#allocation0]]
  $region54: #{tpu_custom_call.1} parent=0
    _
  %s10 = ssub.s32 1, %s8
  %s11 = scalar_select 0, %s10, %s8
  $region1: #{tpu_custom_call.1} parent=0
    #allocation2 [shape = 'u8[2048]{0}', space=vmem, size = 0x800, scoped, tag = 'input window, operand 0, single buffered']
    #allocation3 [shape = 's32[1]{0}', space=sflag, size = 0x4, scoped, tag = 'scoped memory for tpu_custom_call.1']
    #allocation4 [shape = 's32[1]{0}', space=sflag, size = 0x4, scoped, tag = 'scoped memory for tpu_custom_call.1']
    #allocation5 [shape = 'u8[8192]{0}', space=vmem, size = 0x2000, scoped, tag = 'input window, operand 1, single buffered']
    #allocation6 [shape = 's32[1]{0}', space=sflag, size = 0x4, scoped, tag = 'scoped memory for tpu_custom_call.1']
    #allocation7 [shape = 'u8[32768]{0}', space=vmem, size = 0x8000, scoped, tag = 'input window, operand 3, single buffered']
    #allocation8 [shape = 'u8[32768]{0}', space=vmem, size = 0x8000, scoped, tag = 'input window, operand 5, single buffered']
    #allocation9 [shape = 's32[1]{0}', space=sflag, size = 0x4, scoped, tag = 'scoped memory for tpu_custom_call.1']
    #allocation10 [shape = 'u8[4096]{0}', space=vmem, size = 0x1000, scoped, tag = 'output window, operand 0, single buffered']
    %12 = vsyncpa [#allocation3], 0
    %13 = vsyncpa [#allocation6], 0
    %14 = vsyncpa [#allocation9], 0
    %15 = vsyncpa [#allocation4], 0
    // Predicated region
    $region2: #{tpu_custom_call.1} parent=1 // pred_check
      _
    $region3: #{tpu_custom_call.1} parent=1 // pred_check_branch
      %17 = sbr.rel (0) target = $region5
    $region4: #{tpu_custom_call.1} parent=1 // pred_region
      %s19 = ssub.s32 64, 64
      %20 = vsyncadd [#allocation3], %s19
      %s22 = sshll.u32 [#allocation2], 4
      %s23 = int_to_ptr.vmem [resolvable:$true] %s22
      %25 = dma.hbm_to_vmem [thread:$0]  %s0, 64, %s23, [#allocation3]
    $region5: #{tpu_custom_call.1} parent=1 // pred_fallthru
      _
    // Predicated region
    $region6: #{tpu_custom_call.1} parent=1 // pred_check
      _
    $region7: #{tpu_custom_call.1} parent=1 // pred_check_branch
      %27 = sbr.rel (0) target = $region9
    $region8: #{tpu_custom_call.1} parent=1 // pred_region
      %s29 = ssub.s32 256, 256
      %30 = vsyncadd [#allocation6], %s29
      %s31 = sshll.u32 [#allocation5], 4
      %s32 = int_to_ptr.vmem [resolvable:$true] %s31
      %37 = dma.hbm_to_vmem [thread:$0]  %s1, 256, %s32, [#allocation6], 64, 64, 4
    $region9: #{tpu_custom_call.1} parent=1 // pred_fallthru
      _
    // Predicated region
    $region10: #{tpu_custom_call.1} parent=1 // pred_check
      _
    $region11: #{tpu_custom_call.1} parent=1 // pred_check_branch
      %39 = sbr.rel (0) target = $region13
    $region12: #{tpu_custom_call.1} parent=1 // pred_region
      _
    $region13: #{tpu_custom_call.1} parent=1 // pred_fallthru
      _
    // Predicated region
    $region14: #{tpu_custom_call.1} parent=1 // pred_check
      _
    $region15: #{tpu_custom_call.1} parent=1 // pred_check_branch
      %41 = sbr.rel (0) target = $region17
    $region16: #{tpu_custom_call.1} parent=1 // pred_region
      %s43 = ssub.s32 1024, 1024
      %44 = vsyncadd [#allocation6], %s43
      %s45 = sshll.u32 [#allocation7], 4
      %s46 = int_to_ptr.vmem [resolvable:$true] %s45
      %51 = dma.hbm_to_vmem [thread:$0]  %s3, 1024, %s46, [#allocation6], 64, 64, 4
    $region17: #{tpu_custom_call.1} parent=1 // pred_fallthru
      _
    // Predicated region
    $region18: #{tpu_custom_call.1} parent=1 // pred_check
      _
    $region19: #{tpu_custom_call.1} parent=1 // pred_check_branch
      %53 = sbr.rel (0) target = $region21
    $region20: #{tpu_custom_call.1} parent=1 // pred_region
      _
    $region21: #{tpu_custom_call.1} parent=1 // pred_fallthru
      _
    // Predicated region
    $region22: #{tpu_custom_call.1} parent=1 // pred_check
      _
    $region23: #{tpu_custom_call.1} parent=1 // pred_check_branch
      %55 = sbr.rel (0) target = $region25
    $region24: #{tpu_custom_call.1} parent=1 // pred_region
      %s57 = ssub.s32 1024, 1024
      %58 = vsyncadd [#allocation9], %s57
      %s59 = sshll.u32 [#allocation8], 4
      %s60 = int_to_ptr.vmem [resolvable:$true] %s59
      %65 = dma.hbm_to_vmem [thread:$0]  %s5, 1024, %s60, [#allocation9], 64, 64, 4
    $region25: #{tpu_custom_call.1} parent=1 // pred_fallthru
      _
    // Predicated region
    $region26: #{tpu_custom_call.1} parent=1 // pred_check
      _
    $region27: #{tpu_custom_call.1} parent=1 // pred_check_branch
      %67 = sbr.rel (0) target = $region29
    $region28: #{tpu_custom_call.1} parent=1 // pred_region
      _
    $region29: #{tpu_custom_call.1} parent=1 // pred_fallthru
      _
    // Predicated region
    $region30: #{tpu_custom_call.1} parent=1 // pred_check
      _
    $region31: #{tpu_custom_call.1} parent=1 // pred_check_branch
      %69 = sbr.rel (0) target = $region33
    $region32: #{tpu_custom_call.1} parent=1 // pred_region
      %70 = dma.done [#allocation3], 64
    $region33: #{tpu_custom_call.1} parent=1 // pred_fallthru
      _
    // Predicated region
    $region34: #{tpu_custom_call.1} parent=1 // pred_check
      _
    $region35: #{tpu_custom_call.1} parent=1 // pred_check_branch
      %72 = sbr.rel (0) target = $region37
    $region36: #{tpu_custom_call.1} parent=1 // pred_region
      %73 = dma.done [#allocation6], 256
    $region37: #{tpu_custom_call.1} parent=1 // pred_fallthru
      _
    // Predicated region
    $region38: #{tpu_custom_call.1} parent=1 // pred_check
      _
    $region39: #{tpu_custom_call.1} parent=1 // pred_check_branch
      %75 = sbr.rel (0) target = $region41
    $region40: #{tpu_custom_call.1} parent=1 // pred_region
      %76 = dma.done [#allocation6], 1024
    $region41: #{tpu_custom_call.1} parent=1 // pred_fallthru
      _
    // Predicated region
    $region42: #{tpu_custom_call.1} parent=1 // pred_check
      _
    $region43: #{tpu_custom_call.1} parent=1 // pred_check_branch
      %78 = sbr.rel (0) target = $region45
    $region44: #{tpu_custom_call.1} parent=1 // pred_region
      %79 = dma.done [#allocation9], 1024
    $region45: #{tpu_custom_call.1} parent=1 // pred_fallthru
      _
    %v81 = vld [vmem:[#allocation2] sm:$0xf]
    %v82 = vld [vmem:[#allocation5] sm:$0xf]
    %v83 = vld [vmem:[#allocation5 + $0x4] sm:$0xf]
    %v84 = vld [vmem:[#allocation5 + $0x8] sm:$0xf]
    %v85 = vld [vmem:[#allocation5 + $0xc] sm:$0xf]
    %v86 = vld [vmem:[%s2] sm:$0x1]
    %v88 = vlaneseq
    %v89 = vshrl.u32 %v88, 7
    %v90 = vsub.s32 0, %v89
    %v91 = vrot.slane %v86, %v90
    %v97 = vunpack.c.l.b16 %v82
    %v98 = vunpack.c.l.b16 %v83
    %v99 = vunpack.c.l.b16 %v84
    %v100 = vunpack.c.l.b16 %v85
    %v101 = vpack.c.b16 %v98, %v97
    %v102 = vpack.c.b16 %v100, %v99
    %vm105 = vcmask 261120
    %v107 = vsel %vm105, %v81, 0
    %109 = vmatprep.subr.bf16.mxu0 0
    %110 = vmatpush1.bf16.msra.mxu0 0
    %111 = vmatprep.subr.bf16.mxu0 0
    %112 = vmatpush1.bf16.msra.mxu0 0
    %113 = vmatprep.subr.bf16.mxu0 0
    %114 = vmatpush1.bf16.msra.mxu0 0
    %115 = vmatprep.subr.bf16.mxu0 0
    %116 = vmatpush1.bf16.msra.mxu0 0
    %117 = vmatprep.subr.bf16.mxu0 0
    %118 = vmatpush1.bf16.msra.mxu0 0
    %119 = vmatprep.subr.bf16.mxu0 0
    %120 = vmatpush1.bf16.msra.mxu0 0
    %121 = vmatprep.subr.bf16.mxu0 0
    %122 = vmatpush1.bf16.msra.mxu0 %v102
    %123 = vmatprep.subr.bf16.mxu0 0
    %124 = vmatpush1.bf16.msra.mxu0 %v101
    %125 = vmatprep.subr.bf16.mxu0 0
    %126 = vmatpush2.bf16.msra.mxu0 0
    %127 = vmatprep.subr.bf16.mxu0 0
    %128 = vmatpush2.bf16.msra.mxu0 0
    %129 = vmatprep.subr.bf16.mxu0 0
    %130 = vmatpush2.bf16.msra.mxu0 0
    %131 = vmatprep.subr.bf16.mxu0 0
    %132 = vmatpush2.bf16.msra.mxu0 0
    %133 = vmatprep.subr.bf16.mxu0 0
    %134 = vmatpush2.bf16.msra.mxu0 0
    %135 = vmatprep.subr.bf16.mxu0 0
    %136 = vmatpush2.bf16.msra.mxu0 0
    %137 = vmatprep.subr.bf16.mxu0 0
    %138 = vmatpush2.bf16.msra.mxu0 0
    %139 = vmatprep.subr.bf16.mxu0 0
    %140 = vmatpush2.bf16.msra.mxu0 0
    %141 = vmatprep.mubr.bf16.mxu0 0
    %142 = vmatmul.mubr.bf16.gmra.mxu0 %v107
    %v143 = vpop.f32.mrf.mxu0
    %v144 = vadd.f32 %v91, %v143
    %v145 = vpop.f32.mrf.mxu0
    %v146 = vpop.f32.mrf.mxu0
    %v147 = vpop.f32.mrf.mxu0
    %148 = vdwg.mxu0
    %v149 = vmax.f32 %v144, 0.0
    %v150 = vpack.c.bf16 %v149, %v149
    %v151 = vld [vmem:[#allocation7] sm:$0xf]
    %v152 = vld [vmem:[#allocation7 + $0x4] sm:$0xf]
    %v153 = vld [vmem:[#allocation7 + $0x8] sm:$0xf]
    %v154 = vld [vmem:[#allocation7 + $0xc] sm:$0xf]
    %v155 = vld [vmem:[#allocation7 + $0x10] sm:$0xf]
    %v156 = vld [vmem:[#allocation7 + $0x14] sm:$0xf]
    %v157 = vld [vmem:[#allocation7 + $0x18] sm:$0xf]
    %v158 = vld [vmem:[#allocation7 + $0x1c] sm:$0xf]
    %v159 = vld [vmem:[#allocation7 + $0x20] sm:$0xf]
    %v160 = vld [vmem:[#allocation7 + $0x24] sm:$0xf]
    %v161 = vld [vmem:[#allocation7 + $0x28] sm:$0xf]
    %v162 = vld [vmem:[#allocation7 + $0x2c] sm:$0xf]
    %v163 = vld [vmem:[#allocation7 + $0x30] sm:$0xf]
    %v164 = vld [vmem:[#allocation7 + $0x34] sm:$0xf]
    %v165 = vld [vmem:[#allocation7 + $0x38] sm:$0xf]
    %v166 = vld [vmem:[#allocation7 + $0x3c] sm:$0xf]
    %v167 = vld [vmem:[%s4] sm:$0x1]
    %v169 = vlaneseq
    %v170 = vshrl.u32 %v169, 7
    %v171 = vsub.s32 0, %v170
    %v172 = vrot.slane %v167, %v171
    %v190 = vunpack.c.l.b16 %v151
    %v191 = vunpack.c.l.b16 %v152
    %v192 = vunpack.c.l.b16 %v153
    %v193 = vunpack.c.l.b16 %v154
    %v194 = vunpack.c.l.b16 %v155
    %v195 = vunpack.c.l.b16 %v156
    %v196 = vunpack.c.l.b16 %v157
    %v197 = vunpack.c.l.b16 %v158
    %v198 = vunpack.c.l.b16 %v159
    %v199 = vunpack.c.l.b16 %v160
    %v200 = vunpack.c.l.b16 %v161
    %v201 = vunpack.c.l.b16 %v162
    %v202 = vunpack.c.l.b16 %v163
    %v203 = vunpack.c.l.b16 %v164
    %v204 = vunpack.c.l.b16 %v165
    %v205 = vunpack.c.l.b16 %v166
    %v206 = vpack.c.b16 %v191, %v190
    %v207 = vpack.c.b16 %v193, %v192
    %v208 = vpack.c.b16 %v195, %v194
    %v209 = vpack.c.b16 %v197, %v196
    %v210 = vpack.c.b16 %v199, %v198
    %v211 = vpack.c.b16 %v201, %v200
    %v212 = vpack.c.b16 %v203, %v202
    %v213 = vpack.c.b16 %v205, %v204
    %222 = vmatprep.subr.bf16.mxu0 0
    %223 = vmatpush1.bf16.msra.mxu0 %v213
    %224 = vmatprep.subr.bf16.mxu0 0
    %225 = vmatpush1.bf16.msra.mxu0 %v212
    %226 = vmatprep.subr.bf16.mxu0 0
    %227 = vmatpush1.bf16.msra.mxu0 %v211
    %228 = vmatprep.subr.bf16.mxu0 0
    %229 = vmatpush1.bf16.msra.mxu0 %v210
    %230 = vmatprep.subr.bf16.mxu0 0
    %231 = vmatpush1.bf16.msra.mxu0 %v209
    %232 = vmatprep.subr.bf16.mxu0 0
    %233 = vmatpush1.bf16.msra.mxu0 %v208
    %234 = vmatprep.subr.bf16.mxu0 0
    %235 = vmatpush1.bf16.msra.mxu0 %v207
    %236 = vmatprep.subr.bf16.mxu0 0
    %237 = vmatpush1.bf16.msra.mxu0 %v206
    %238 = vmatprep.subr.bf16.mxu0 0
    %239 = vmatpush2.bf16.msra.mxu0 0
    %240 = vmatprep.subr.bf16.mxu0 0
    %241 = vmatpush2.bf16.msra.mxu0 0
    %242 = vmatprep.subr.bf16.mxu0 0
    %243 = vmatpush2.bf16.msra.mxu0 0
    %244 = vmatprep.subr.bf16.mxu0 0
    %245 = vmatpush2.bf16.msra.mxu0 0
    %246 = vmatprep.subr.bf16.mxu0 0
    %247 = vmatpush2.bf16.msra.mxu0 0
    %248 = vmatprep.subr.bf16.mxu0 0
    %249 = vmatpush2.bf16.msra.mxu0 0
    %250 = vmatprep.subr.bf16.mxu0 0
    %251 = vmatpush2.bf16.msra.mxu0 0
    %252 = vmatprep.subr.bf16.mxu0 0
    %253 = vmatpush2.bf16.msra.mxu0 0
    %254 = vmatprep.mubr.bf16.mxu0 0
    %255 = vmatmul.mubr.bf16.gmra.mxu0 %v150
    %v256 = vpop.f32.mrf.mxu0
    %v257 = vadd.f32 %v172, %v256
    %v258 = vpop.f32.mrf.mxu0
    %v259 = vpop.f32.mrf.mxu0
    %v260 = vpop.f32.mrf.mxu0
    %261 = vdwg.mxu0
    %v262 = vmax.f32 %v257, 0.0
    %v263 = vpack.c.bf16 %v262, %v262
    %v264 = vld [vmem:[#allocation8] sm:$0xf]
    %v265 = vld [vmem:[#allocation8 + $0x4] sm:$0xf]
    %v266 = vld [vmem:[#allocation8 + $0x8] sm:$0xf]
    %v267 = vld [vmem:[#allocation8 + $0xc] sm:$0xf]
    %v268 = vld [vmem:[#allocation8 + $0x10] sm:$0xf]
    %v269 = vld [vmem:[#allocation8 + $0x14] sm:$0xf]
    %v270 = vld [vmem:[#allocation8 + $0x18] sm:$0xf]
    %v271 = vld [vmem:[#allocation8 + $0x1c] sm:$0xf]
    %v272 = vld [vmem:[#allocation8 + $0x20] sm:$0xf]
    %v273 = vld [vmem:[#allocation8 + $0x24] sm:$0xf]
    %v274 = vld [vmem:[#allocation8 + $0x28] sm:$0xf]
    %v275 = vld [vmem:[#allocation8 + $0x2c] sm:$0xf]
    %v276 = vld [vmem:[#allocation8 + $0x30] sm:$0xf]
    %v277 = vld [vmem:[#allocation8 + $0x34] sm:$0xf]
    %v278 = vld [vmem:[#allocation8 + $0x38] sm:$0xf]
    %v279 = vld [vmem:[#allocation8 + $0x3c] sm:$0xf]
    %v280 = vld [vmem:[%s6] sm:$0x1]
    %v282 = vlaneseq
    %v283 = vshrl.u32 %v282, 7
    %v284 = vsub.s32 0, %v283
    %v285 = vrot.slane %v280, %v284
    %v303 = vunpack.c.l.b16 %v264
    %v304 = vunpack.c.l.b16 %v265
    %v305 = vunpack.c.l.b16 %v266
    %v306 = vunpack.c.l.b16 %v267
    %v307 = vunpack.c.l.b16 %v268
    %v308 = vunpack.c.l.b16 %v269
    %v309 = vunpack.c.l.b16 %v270
    %v310 = vunpack.c.l.b16 %v271
    %v311 = vunpack.c.l.b16 %v272
    %v312 = vunpack.c.l.b16 %v273
    %v313 = vunpack.c.l.b16 %v274
    %v314 = vunpack.c.l.b16 %v275
    %v315 = vunpack.c.l.b16 %v276
    %v316 = vunpack.c.l.b16 %v277
    %v317 = vunpack.c.l.b16 %v278
    %v318 = vunpack.c.l.b16 %v279
    %v319 = vpack.c.b16 %v304, %v303
    %v320 = vpack.c.b16 %v306, %v305
    %v321 = vpack.c.b16 %v308, %v307
    %v322 = vpack.c.b16 %v310, %v309
    %v323 = vpack.c.b16 %v312, %v311
    %v324 = vpack.c.b16 %v314, %v313
    %v325 = vpack.c.b16 %v316, %v315
    %v326 = vpack.c.b16 %v318, %v317
    %335 = vmatprep.subr.bf16.mxu0 0
    %336 = vmatpush1.bf16.msra.mxu0 %v326
    %337 = vmatprep.subr.bf16.mxu0 0
    %338 = vmatpush1.bf16.msra.mxu0 %v325
    %339 = vmatprep.subr.bf16.mxu0 0
    %340 = vmatpush1.bf16.msra.mxu0 %v324
    %341 = vmatprep.subr.bf16.mxu0 0
    %342 = vmatpush1.bf16.msra.mxu0 %v323
    %343 = vmatprep.subr.bf16.mxu0 0
    %344 = vmatpush1.bf16.msra.mxu0 %v322
    %345 = vmatprep.subr.bf16.mxu0 0
    %346 = vmatpush1.bf16.msra.mxu0 %v321
    %347 = vmatprep.subr.bf16.mxu0 0
    %348 = vmatpush1.bf16.msra.mxu0 %v320
    %349 = vmatprep.subr.bf16.mxu0 0
    %350 = vmatpush1.bf16.msra.mxu0 %v319
    %351 = vmatprep.subr.bf16.mxu0 0
    %352 = vmatpush2.bf16.msra.mxu0 0
    %353 = vmatprep.subr.bf16.mxu0 0
    %354 = vmatpush2.bf16.msra.mxu0 0
    %355 = vmatprep.subr.bf16.mxu0 0
    %356 = vmatpush2.bf16.msra.mxu0 0
    %357 = vmatprep.subr.bf16.mxu0 0
    %358 = vmatpush2.bf16.msra.mxu0 0
    %359 = vmatprep.subr.bf16.mxu0 0
    %360 = vmatpush2.bf16.msra.mxu0 0
    %361 = vmatprep.subr.bf16.mxu0 0
    %362 = vmatpush2.bf16.msra.mxu0 0
    %363 = vmatprep.subr.bf16.mxu0 0
    %364 = vmatpush2.bf16.msra.mxu0 0
    %365 = vmatprep.subr.bf16.mxu0 0
    %366 = vmatpush2.bf16.msra.mxu0 0
    %367 = vmatprep.mubr.bf16.mxu0 0
    %368 = vmatmul.mubr.bf16.gmra.mxu0 %v263
    %v369 = vpop.f32.mrf.mxu0
    %v370 = vadd.f32 %v285, %v369
    %v371 = vpop.f32.mrf.mxu0
    %v372 = vpop.f32.mrf.mxu0
    %v373 = vpop.f32.mrf.mxu0
    %374 = vdwg.mxu0
    %375 = vst [vmem:[#allocation10] sm:$0xff] %v370
    // Predicated region
    $region46: #{tpu_custom_call.1} parent=1 // pred_check
      _
    $region47: #{tpu_custom_call.1} parent=1 // pred_check_branch
      %377 = sbr.rel (0) target = $region49
    $region48: #{tpu_custom_call.1} parent=1 // pred_region
      %s379 = ssub.s32 128, 128
      %380 = vsyncadd [#allocation4], %s379
      %s382 = sshll.u32 [#allocation10], 4
      %s383 = int_to_ptr.vmem [resolvable:$true] %s382
      %385 = dma.vmem_to_hbm [thread:$0]  %s383, 128, %s7, [#allocation4]
    $region49: #{tpu_custom_call.1} parent=1 // pred_fallthru
      _
    // Predicated region
    $region50: #{tpu_custom_call.1} parent=1 // pred_check
      _
    $region51: #{tpu_custom_call.1} parent=1 // pred_check_branch
      %387 = sbr.rel (0) target = $region53
    $region52: #{tpu_custom_call.1} parent=1 // pred_region
      %388 = dma.done [#allocation4], 128
    $region53: #{tpu_custom_call.1} parent=1 // pred_fallthru
      _
    %389 = vsyncpa [#allocation3], 1
    %390 = vsyncpa [#allocation6], 1
    %391 = vsyncpa [#allocation9], 1
    %392 = vsyncpa [#allocation4], 1

</llo_original>
